<compile_context>
chip_gen: v5e
topology: v5e:2x2
jax: 0.10.0
libtpu: 0.0.40
codegen_flags: <defaults>
</compile_context>

<pallas_src>
import jax
import jax.numpy as jnp
from jax.experimental import pallas as pl
from jax.experimental.pallas import tpu as pltpu


def _channel_w_kernel(w_ref, x_ref, o_ref):
    # w_ref: (1, c_blk, 1)       -- per-channel scales for this channel block
    # x_ref: (n_blk, c_blk, HW)  -- lane-dense flattened spatial tile
    # o_ref: (n_blk, c_blk, HW)
    o_ref[...] = x_ref[...] * w_ref[...]  # VPU broadcast over batch + lane dims


def _sublane_align(dtype):
    # Sub-32-bit dtypes pack rows along sublanes: align channel blocks to it.
    return {4: 8, 2: 16, 1: 32}.get(jnp.dtype(dtype).itemsize, 8)


def _vmem_config():
    """(per-block byte budget, vmem_limit_bytes) per TPU generation."""
    # Safe default for v7x (64 MiB VMEM/TC): 5 MiB blocks, x+out double-buffered
    # = ~20 MiB, well under a 40 MiB scoped limit.
    budget, limit = 5 * 1024 * 1024, 40 * 1024 * 1024
    try:
        cap = pltpu.get_tpu_info().vmem_capacity_bytes
        if cap >= 100 * 1024 * 1024:  # v5e / v6e: 128 MiB physical VMEM
            budget, limit = 12 * 1024 * 1024, 64 * 1024 * 1024
    except Exception:
        pass
    return budget, limit


def _pick_blocks(N, C, HW, dtype, budget_bytes):
    """Pick (n_blk, c_blk) so each x tile is multi-MiB but under budget."""
    itemsize = jnp.dtype(dtype).itemsize
    align = _sublane_align(dtype)
    row_bytes = max(1, HW * itemsize)  # one channel's spatial row

    if C * row_bytes <= budget_bytes:
        # Whole channel axis fits per image: grow the batch block to the budget
        # (keeps late ResNet stages, e.g. C=2048 HW=49, off the overhead cliff).
        c_blk = C
        n_blk = min(N, max(1, budget_bytes // (C * row_bytes)))
    else:
        # Ragged channel blocking: largest sublane-aligned block under budget.
        max_rows = max(1, budget_bytes // row_bytes)
        c_blk = max(align, (max_rows // align) * align)
        c_blk = min(c_blk, C)
        n_blk = 1

    # Ensure the grid has at least 2 steps so both v7x TensorCores get work
    # (costs one extra ~0.35us step on single-TC v5e/v6e: negligible).
    if pl.cdiv(C, c_blk) * pl.cdiv(N, n_blk) == 1:
        if N > 1:
            n_blk = pl.cdiv(N, 2)
        elif C > align:
            c_blk = align * pl.cdiv(pl.cdiv(C, 2), align)
    return n_blk, c_blk


def channel_w_forward(x, w1):
    """x: (N, C, H, W), w1: (1, C, 1, 1) -> (N, C, H, W)"""
    N, C, H, W = x.shape
    assert w1.shape == (1, C, 1, 1)
    HW = H * W
    itemsize = jnp.dtype(x.dtype).itemsize

    # Lane-dense layout: collapse spatial dims into the last axis.
    x2 = x.reshape(N, C, HW)
    w2 = w1.reshape(1, C, 1).astype(x.dtype)

    budget, vmem_limit = _vmem_config()
    n_blk, c_blk = _pick_blocks(N, C, HW, x.dtype, budget)

    # Grid order (channel_block, batch_block): batch varies fastest, so the
    # weight block index is unchanged across consecutive steps (no re-DMA).
    grid = (pl.cdiv(C, c_blk), pl.cdiv(N, n_blk))

    cost = pl.CostEstimate(
        flops=N * C * HW,
        transcendentals=0,
        bytes_accessed=2 * N * C * HW * itemsize + C * itemsize,
    )

    out2 = pl.pallas_call(
        _channel_w_kernel,
        out_shape=jax.ShapeDtypeStruct((N, C, HW), x.dtype),
        grid_spec=pltpu.PrefetchScalarGridSpec(
            num_scalar_prefetch=0,
            grid=grid,
            in_specs=[
                # per-channel-block weights; constant across the batch axis
                pl.BlockSpec((1, c_blk, 1), lambda cb, nb: (0, cb, 0)),
                # multi-image, multi-channel, full-spatial lane-dense tile
                pl.BlockSpec((n_blk, c_blk, HW), lambda cb, nb: (nb, cb, 0)),
            ],
            out_specs=pl.BlockSpec((n_blk, c_blk, HW), lambda cb, nb: (nb, cb, 0)),
        ),
        compiler_params=pltpu.CompilerParams(
            dimension_semantics=("parallel", "parallel"),
            vmem_limit_bytes=vmem_limit,
        ),
        cost_estimate=cost,
    )(w2, x2)

    return out2.reshape(N, C, H, W)


if __name__ == "__main__":
    key = jax.random.PRNGKey(0)
    k_w, k_x = jax.random.split(key)

    N, C, H, W = 2, 4, 16, 16  # small shapes; C == out_ch

    # Matches torch.rand(1, out_ch, 1, 1) * 0.001 (uniform [0,1) * 0.001)
    w1 = jax.random.uniform(k_w, (1, C, 1, 1), dtype=jnp.float32) * 0.001
    x = jax.random.normal(k_x, (N, C, H, W), dtype=jnp.float32)

    out = channel_w_forward(x, w1)
    jax.block_until_ready(out)

    # correctness check against plain-JAX reference (broadcasted multiply)
    ref = w1 * x
    assert out.shape == x.shape
    assert jnp.allclose(out, ref, atol=1e-6), "mismatch vs reference"

    print("KERNEL_OK")
</pallas_src>

<mosaic_0001>
module attributes {stable_mosaic.version = 11 : i64} {
  func.func @_channel_w_kernel(%arg0: i32, %arg1: i32, %arg2: memref<1x4x1xf32, #tpu.memory_space<vmem>>, %arg3: memref<1x4x256xf32, #tpu.memory_space<vmem>>, %arg4: memref<1x4x256xf32, #tpu.memory_space<vmem>>) attributes {dimension_semantics = [#tpu.dimension_semantics<parallel>, #tpu.dimension_semantics<parallel>], iteration_bounds = array<i64: 1, 2>, scalar_prefetch = 0 : i64, scratch_operands = 0 : i64, tpu.core_type = #tpu.core_type<tc>, window_params = [{transform_indices = @transform_0, window_bounds = array<i64: 1, 4, 1>}, {transform_indices = @transform_1, window_bounds = array<i64: 1, 4, 256>}, {transform_indices = @transform_2, window_bounds = array<i64: 1, 4, 256>}]} {
    %c0 = arith.constant 0 : index
    %c0_0 = arith.constant 0 : index
    %c0_1 = arith.constant 0 : index
    %0 = vector.load %arg3[%c0, %c0_0, %c0_1] : memref<1x4x256xf32, #tpu.memory_space<vmem>>, vector<1x4x256xf32>
    %c0_2 = arith.constant 0 : index
    %c0_3 = arith.constant 0 : index
    %c0_4 = arith.constant 0 : index
    %1 = vector.load %arg2[%c0_2, %c0_3, %c0_4] : memref<1x4x1xf32, #tpu.memory_space<vmem>>, vector<1x4x1xf32>
    %2 = vector.broadcast %1 : vector<1x4x1xf32> to vector<1x4x256xf32>
    %3 = arith.mulf %0, %2 : vector<1x4x256xf32>
    %c0_5 = arith.constant 0 : index
    %c0_6 = arith.constant 0 : index
    %c0_7 = arith.constant 0 : index
    %4 = vector.load %arg4[%c0_5, %c0_6, %c0_7] : memref<1x4x256xf32, #tpu.memory_space<vmem>>, vector<1x4x256xf32>
    tpu.vector_store %arg4[%c0_5, %c0_6, %c0_7], %3 {strides = array<i32>} : memref<1x4x256xf32, #tpu.memory_space<vmem>>, vector<1x4x256xf32>,
    return
  }
  func.func @transform_0(%arg0: i32, %arg1: i32) -> (i32, i32, i32) {
    %c0_i32 = arith.constant 0 : i32
    %c0_i32_0 = arith.constant 0 : i32
    %c0_i32_1 = arith.constant 0 : i32
    return %c0_i32, %arg0, %c0_i32_0 : i32, i32, i32
  }
  func.func @transform_1(%arg0: i32, %arg1: i32) -> (i32, i32, i32) {
    %c0_i32 = arith.constant 0 : i32
    %c0_i32_0 = arith.constant 0 : i32
    return %arg1, %arg0, %c0_i32 : i32, i32, i32
  }
  func.func @transform_2(%arg0: i32, %arg1: i32) -> (i32, i32, i32) {
    %c0_i32 = arith.constant 0 : i32
    %c0_i32_0 = arith.constant 0 : i32
    return %arg1, %arg0, %c0_i32 : i32, i32, i32
  }
}

</mosaic_0001>

<llo_original>
// kernel: tpu_custom_call.1
$region0: #{tpu_custom_call.1}
  #allocation0 [shape = 'u32[]', space=smem, size = 0x4, offset = 0x4, fixed_abs, tag = 'smem constant byte address 0x4 - core index']
  #allocation1 [shape = 'u32[72,128]{1,0:T(1,128)}', space=vmem, size = 0x9000, scoped, tag = 'internal scratch']
  %s0 = inlined_call_operand.vmem [shape: f32[1,4,1], index: 0, kind: input, shape index: {}]
  %s1 = inlined_call_operand.hbm [shape: f32[2,4,256], index: 1, kind: input, shape index: {}]
  %s2 = inlined_call_operand.hbm [shape: f32[2,4,256], index: 2, kind: output, shape index: {}]
  %s3 = sld [smem:[#allocation0]]
  $region45: #{tpu_custom_call.1} parent=0
    _
  %s5 = ssub.s32 1, %s3
  %s6 = scalar_select 0, %s5, %s3
  $region1: #{tpu_custom_call.1} parent=0
    #allocation2 [shape = 'u8[8192]{0}', space=vmem, size = 0x2000, scoped, tag = 'input window, operand 1']
    #allocation3 [shape = 's32[2]{0}', space=sflag, size = 0x8, scoped, tag = 'scoped memory for tpu_custom_call.1']
    #allocation4 [shape = 's32[2]{0}', space=sflag, size = 0x8, scoped, tag = 'scoped memory for tpu_custom_call.1']
    #allocation5 [shape = 'u8[8192]{0}', space=vmem, size = 0x2000, scoped, tag = 'output window, operand 0']
    %7 = vsyncpa [#allocation3], 0
    %s8 = scalar_lea.sflag [#allocation3], 1
    %9 = vsyncpa %s8, 0
    %10 = vsyncpa [#allocation4], 0
    %s11 = scalar_lea.sflag [#allocation4], 1
    %12 = vsyncpa %s11, 0
    loop: start=0, step=1, limit=4
    $region2: #{tpu_custom_call.1} parent=1 // loop_pre_header
      _
    $region3: #{tpu_custom_call.1} parent=1 // loop_header
      %s14 = sphi 0, %s18
      %p15 = scmp.ge.s32.totalorder %s14, 4
      %s21 = sphi 0, %s33
      %s22 = sphi 0, %s29
      %s23 = sphi 0, %s21
      %s24 = sphi 0, %s22
      %s25 = sphi 0, %s23
      %s26 = sphi 0, %s24
      %s36 = sphi 0, %s38
      %s39 = sphi 0, %s36
      %s40 = sphi 0, %s39
      %s56 = sphi 0, %s40
      %s64 = sphi 0, %s66
      %s67 = sphi 0, %s64
      %s68 = sphi 0, %s67
      %s84 = sphi 0, %s68
      %s92 = sphi 0, %s94
      %s95 = sphi 0, %s92
      %s96 = sphi 0, %s95
      %s112 = sphi 0, %s96
    $region4: #{tpu_custom_call.1} parent=1 // loop_header_branch
      %17 = sbr.rel (%p15) target = $region8
    $region5: #{tpu_custom_call.1} parent=1 // loop_body
      %s19 = ssub.s32 %s14, 1
      %s20 = ssub.s32 %s14, 2
      %s27 = sadd.s32 1, %s22
      %p28 = scmp.ge.s32.totalorder %s27, 2
      %s29 = scalar_select %p28, 0, %s27
      %s30 = sadd.s32 1, %s21
      %s31 = scalar_select %p28, %s30, %s21
      %p32 = scmp.ge.s32.totalorder %s31, 1
      %s33 = scalar_select %p32, 0, %s31
      %s34 = ssub.s32 %s21, %s33
      %p35 = scmp.eq.s32.totalorder %s34, 0
      %s37 = sadd.s32 %s36, 1
      %s38 = scalar_select %p35, %s36, %s37
      %p41 = pneg %p35
      %p42 = scmp.eq.s32.totalorder %s14, 1
      %p43 = por %p41, %p42
      %p44 = scmp.ne.s32.totalorder %s36, %s39
      %p45 = scmp.eq.s32.totalorder %s14, 0
      %p46 = por %p44, %p45
      %p47 = scmp.ne.s32.totalorder %s36, %s39
      %p48 = scmp.eq.s32.totalorder %s19, 1
      %p49 = por %p47, %p48
      %p50 = scmp.ne.s32.totalorder %s39, %s40
      %p51 = scmp.eq.s32.totalorder %s19, 0
      %p52 = por %p50, %p51
      %p53 = scmp.ne.s32.totalorder %s39, %s40
      %p54 = scmp.eq.s32.totalorder %s20, 1
      %p55 = por %p53, %p54
      %p57 = scmp.ne.s32.totalorder %s40, %s56
      %p58 = scmp.eq.s32.totalorder %s20, 0
      %p59 = por %p57, %p58
      %s60 = ssub.s32 %s22, %s29
      %s61 = ssub.s32 %s21, %s33
      %s62 = sor.u32 %s60, %s61
      %p63 = scmp.eq.s32.totalorder %s62, 0
      %s65 = sadd.s32 %s64, 1
      %s66 = scalar_select %p63, %s64, %s65
      %p69 = pneg %p63
      %p70 = scmp.eq.s32.totalorder %s14, 1
      %p71 = por %p69, %p70
      %p72 = scmp.ne.s32.totalorder %s64, %s67
      %p73 = scmp.eq.s32.totalorder %s14, 0
      %p74 = por %p72, %p73
      %p75 = scmp.ne.s32.totalorder %s64, %s67
      %p76 = scmp.eq.s32.totalorder %s19, 1
      %p77 = por %p75, %p76
      %p78 = scmp.ne.s32.totalorder %s67, %s68
      %p79 = scmp.eq.s32.totalorder %s19, 0
      %p80 = por %p78, %p79
      %p81 = scmp.ne.s32.totalorder %s67, %s68
      %p82 = scmp.eq.s32.totalorder %s20, 1
      %p83 = por %p81, %p82
      %p85 = scmp.ne.s32.totalorder %s68, %s84
      %p86 = scmp.eq.s32.totalorder %s20, 0
      %p87 = por %p85, %p86
      %s88 = ssub.s32 %s22, %s29
      %s89 = ssub.s32 %s21, %s33
      %s90 = sor.u32 %s88, %s89
      %p91 = scmp.eq.s32.totalorder %s90, 0
      %s93 = sadd.s32 %s92, 1
      %s94 = scalar_select %p91, %s92, %s93
      %p97 = pneg %p91
      %p98 = scmp.eq.s32.totalorder %s14, 1
      %p99 = por %p97, %p98
      %p100 = scmp.ne.s32.totalorder %s92, %s95
      %p101 = scmp.eq.s32.totalorder %s14, 0
      %p102 = por %p100, %p101
      %p103 = scmp.ne.s32.totalorder %s92, %s95
      %p104 = scmp.eq.s32.totalorder %s19, 1
      %p105 = por %p103, %p104
      %p106 = scmp.ne.s32.totalorder %s95, %s96
      %p107 = scmp.eq.s32.totalorder %s19, 0
      %p108 = por %p106, %p107
      %p109 = scmp.ne.s32.totalorder %s95, %s96
      %p110 = scmp.eq.s32.totalorder %s20, 1
      %p111 = por %p109, %p110
      %p113 = scmp.ne.s32.totalorder %s96, %s112
      %p114 = scmp.eq.s32.totalorder %s20, 0
      %p115 = por %p113, %p114
      %p116 = scmp.le.s32.totalorder 1, %s14
      %p117 = scmp.lt.s32.totalorder %s14, 3
      %p118 = pnand %p116, %p117
      %p119 = pneg %p118
      // Predicated region
      $region9: #{tpu_custom_call.1} parent=5 // pred_check
        _
      $region10: #{tpu_custom_call.1} parent=5 // pred_check_branch
        %121 = sbr.rel (%p118) target = $region12
      $region11: #{tpu_custom_call.1} parent=5 // pred_region
        %s122 = ssub.s32 %s14, 1
        // Predicated region
        $region13: #{tpu_custom_call.1} parent=11 // pred_check
          %p123 = pneg %p52
        $region14: #{tpu_custom_call.1} parent=11 // pred_check_branch
          %125 = sbr.rel (%p123) target = $region16
        $region15: #{tpu_custom_call.1} parent=11 // pred_region
          %p126 = scmp.lt.s32.totalorder %s23, 0
          %s127 = scalar_select %p126, %s23, 0
          %s128 = smul.addr %s127, 4
          %s129 = scalar_lea.vmem %s0, %s128
        $region16: #{tpu_custom_call.1} parent=11 // pred_fallthru
          _
      $region12: #{tpu_custom_call.1} parent=5 // pred_fallthru
        _
      %p130 = scmp.lt.s32.totalorder %s14, 2
      // Predicated region
      $region17: #{tpu_custom_call.1} parent=5 // pred_check
        %p131 = pneg %p130
      $region18: #{tpu_custom_call.1} parent=5 // pred_check_branch
        %133 = sbr.rel (%p131) target = $region20
      $region19: #{tpu_custom_call.1} parent=5 // pred_region
        // Predicated region
        $region21: #{tpu_custom_call.1} parent=19 // pred_check
          %p134 = pneg %p74
        $region22: #{tpu_custom_call.1} parent=19 // pred_check_branch
          %136 = sbr.rel (%p134) target = $region24
        $region23: #{tpu_custom_call.1} parent=19 // pred_region
          %s137 = sand.u32 %s64, 1
          %s138 = scalar_lea.sflag [#allocation3], %s137
          %s139 = sand.u32 %s64, 1
          %s140 = smul.addr %s139, 8
          %s141 = scalar_lea.vmem [#allocation2], %s140
          %143 = vsyncadd %s138, 0
          %s144 = smul.addr %s21, 2
          %s145 = smul.addr %s22, 2
          %s146 = sadd.s32 %s144, %s145
          %s147 = smul.addr %s146, 4
          %s148 = scalar_lea.hbm %s1, %s147
          %s150 = sshll.u32 %s148, 4
          %s151 = int_to_ptr.hbm [resolvable:$true] %s150
          %s152 = sshll.u32 %s141, 4
          %s153 = int_to_ptr.vmem [resolvable:$true] %s152
          %155 = dma.hbm_to_vmem [thread:$0]  %s151, 128, %s153, %s138
        $region24: #{tpu_custom_call.1} parent=19 // pred_fallthru
          _
      $region20: #{tpu_custom_call.1} parent=5 // pred_fallthru
        _
      %p156 = scmp.le.s32.totalorder 1, %s14
      %p157 = scmp.lt.s32.totalorder %s14, 3
      %p158 = pnand %p156, %p157
      %p159 = pneg %p158
      // Predicated region
      $region25: #{tpu_custom_call.1} parent=5 // pred_check
        _
      $region26: #{tpu_custom_call.1} parent=5 // pred_check_branch
        %161 = sbr.rel (%p158) target = $region28
      $region27: #{tpu_custom_call.1} parent=5 // pred_region
        %s162 = ssub.s32 %s14, 1
        %s163 = sand.u32 %s67, 1
        %s164 = scalar_lea.sflag [#allocation3], %s163
        %s165 = sand.u32 %s67, 1
        %s166 = smul.addr %s165, 8
        %s167 = scalar_lea.vmem [#allocation2], %s166
        // Predicated region
        $region29: #{tpu_custom_call.1} parent=27 // pred_check
          %p168 = pneg %p80
        $region30: #{tpu_custom_call.1} parent=27 // pred_check_branch
          %170 = sbr.rel (%p168) target = $region32
        $region31: #{tpu_custom_call.1} parent=27 // pred_region
          %172 = dma.done %s164, 128
        $region32: #{tpu_custom_call.1} parent=27 // pred_fallthru
          _
        %p173 = scmp.lt.s32.totalorder %s23, 0
        %s174 = scalar_select %p173, %s23, 0
        %s175 = smul.addr %s174, 4
        %s176 = scalar_lea.vmem %s0, %s175
        %p177 = pneg %p52
        %p178 = pneg %p49
        %s179 = sand.u32 %s67, 1
        %s180 = scalar_lea.sflag [#allocation3], %s179
        %s181 = sand.u32 %s67, 1
        %s182 = smul.addr %s181, 8
        %s183 = scalar_lea.vmem [#allocation2], %s182
        %p184 = pneg %p80
        %p185 = pneg %p77
        %p186 = pneg %p108
        %p187 = pneg %p105
        %s188 = sand.u32 %s95, 1
        %s189 = scalar_lea.sflag [#allocation4], %s188
        %s190 = sand.u32 %s95, 1
        %s191 = smul.addr %s190, 8
        %s192 = scalar_lea.vmem [#allocation5], %s191
        %p193 = scmp.lt.s32.totalorder %s23, 0
        %s194 = scalar_select %p193, %s23, 0
        %s195 = smul.addr %s194, 4
        %s196 = scalar_lea.vmem %s0, %s195
        %v197 = vld [vmem:[%s167] sm:$0xff]
        %v198 = vld [vmem:[%s196] sm:$0xf]
        %200 = vset.pattern.permute.xlu0 0
        %201 = vperm.xlu0 %200, %v198
        %v202 = vpop.permute.xlu0 %201
        %v204 = vunpack.c.l.s4 839922192
        %v205 = vunpack.c.0.s8 %v204
        %v206 = vperm.slane %v202, %v205
        %v208 = vmul.f32 %v197, %v206
        %209 = vst [vmem:[%s192] sm:$0xff] %v208
        %s210 = sand.u32 %s95, 1
        %s211 = scalar_lea.sflag [#allocation4], %s210
        %s212 = sand.u32 %s95, 1
        %s213 = smul.addr %s212, 8
        %s214 = scalar_lea.vmem [#allocation5], %s213
        // Predicated region
        $region33: #{tpu_custom_call.1} parent=27 // pred_check
          %p215 = pneg %p105
        $region34: #{tpu_custom_call.1} parent=27 // pred_check_branch
          %217 = sbr.rel (%p215) target = $region36
        $region35: #{tpu_custom_call.1} parent=27 // pred_region
          %219 = vsyncadd %s211, 0
          %s220 = smul.addr %s23, 2
          %s221 = smul.addr %s24, 2
          %s222 = sadd.s32 %s220, %s221
          %s223 = smul.addr %s222, 4
          %s224 = scalar_lea.hbm %s2, %s223
          %s226 = sshll.u32 %s214, 4
          %s227 = int_to_ptr.vmem [resolvable:$true] %s226
          %s228 = sshll.u32 %s224, 4
          %s229 = int_to_ptr.hbm [resolvable:$true] %s228
          %231 = dma.vmem_to_hbm [thread:$0]  %s227, 128, %s229, %s211
        $region36: #{tpu_custom_call.1} parent=27 // pred_fallthru
          _
      $region28: #{tpu_custom_call.1} parent=5 // pred_fallthru
        _
      %p232 = scmp.le.s32.totalorder 2, %s14
      // Predicated region
      $region37: #{tpu_custom_call.1} parent=5 // pred_check
        %p233 = pneg %p232
      $region38: #{tpu_custom_call.1} parent=5 // pred_check_branch
        %235 = sbr.rel (%p233) target = $region40
      $region39: #{tpu_custom_call.1} parent=5 // pred_region
        %s236 = ssub.s32 %s14, 2
        // Predicated region
        $region41: #{tpu_custom_call.1} parent=39 // pred_check
          %p237 = pneg %p111
        $region42: #{tpu_custom_call.1} parent=39 // pred_check_branch
          %239 = sbr.rel (%p237) target = $region44
        $region43: #{tpu_custom_call.1} parent=39 // pred_region
          %s240 = sand.u32 %s96, 1
          %s241 = scalar_lea.sflag [#allocation4], %s240
          %s242 = sand.u32 %s96, 1
          %s243 = smul.addr %s242, 8
          %s244 = scalar_lea.vmem [#allocation5], %s243
          %246 = dma.done %s241, 128
        $region44: #{tpu_custom_call.1} parent=39 // pred_fallthru
          _
      $region40: #{tpu_custom_call.1} parent=5 // pred_fallthru
        _
    $region6: #{tpu_custom_call.1} parent=1 // loop_footer
      %s18 = sadd.s32 1, %s14
    $region7: #{tpu_custom_call.1} parent=1 // loop_footer_branch
      %13 = sbr.rel target = $region3
    $region8: #{tpu_custom_call.1} parent=1 // loop_exit
      _
    %247 = vsyncpa [#allocation3], 1
    %s248 = scalar_lea.sflag [#allocation3], 1
    %249 = vsyncpa %s248, 1
    %250 = vsyncpa [#allocation4], 1
    %s251 = scalar_lea.sflag [#allocation4], 1
    %252 = vsyncpa %s251, 1

</llo_original>
